<compile_context>
chip_gen: v5e
topology: v5e:2x2
jax: 0.10.0
libtpu: 0.0.40
codegen_flags: <defaults>
</compile_context>

<pallas_src>
import math
import jax
import jax.numpy as jnp
from jax import lax
from jax.experimental import pallas as pl
from jax.experimental.pallas import tpu as pltpu

EPS = 1e-5          # nn.InstanceNorm1d default eps
NEG_SLOPE = 0.2     # nn.LeakyReLU(0.2)
INV_SQRT2 = 1.0 / math.sqrt(2.0)


# --------------------------------- kernel ---------------------------------

def adain_resblk_kernel(x_ref, smean_ref, sbx_ref, st1_ref, st2_ref,
                        w1_ref, w2sc_ref, cb_ref, o_ref):
    """One grid step processes a (C, BB*L) slab (BB batch elems packed on lanes)."""
    x = x_ref[...]                       # (Cin, N) f32
    smean = smean_ref[...]               # (N, BB)  per-segment mean matrix (pre-divided by L)
    sbx = sbx_ref[...]                   # (BB+2, N): rows[:BB]=segment broadcast, then edge masks
    bb = smean.shape[1]
    seg_bcast = sbx[:bb, :]              # (BB, N)
    not_first = sbx[bb:bb + 1, :]        # (1, N): 0.0 at every segment start
    not_last = sbx[bb + 1:bb + 2, :]     # (1, N): 0.0 at every segment end

    style1 = st1_ref[0]                  # (2*Cin, BB): rows[:Cin]=1+gamma1, rows[Cin:]=beta1
    style2 = st2_ref[0]                  # (2*Cout, BB)
    w1 = w1_ref[...]                     # (Cout, 3*Cin)  conv1 taps [prev|mid|next]
    w2sc = w2sc_ref[...]                 # (Cout, 3*Cout+Cin)  (conv2 taps | 1x1 shortcut) / sqrt(2)
    cb = cb_ref[...]                     # (Cout, 2): [conv1_b, conv2_b/sqrt(2)]
    mm_dtype = w1.dtype                  # bf16 (v6e/v7x fast path) or f32

    def adain(y, style):
        # Per-(channel, batch-segment) instance norm + AdaIN affine on the
        # lane-packed layout.  Stats/broadcast via small per-segment matrices.
        c = y.shape[0]
        mean = jnp.dot(y, smean, preferred_element_type=jnp.float32)      # (c, BB)
        ex2 = jnp.dot(y * y, smean, preferred_element_type=jnp.float32)   # (c, BB)
        rstd = lax.rsqrt(ex2 - mean * mean + EPS)
        scale = style[:c, :] * rstd                   # (1+gamma) / std
        shift = style[c:, :] - scale * mean           # beta - scale * mean
        scale_b = jnp.dot(scale, seg_bcast, preferred_element_type=jnp.float32)
        shift_b = jnp.dot(shift, seg_bcast, preferred_element_type=jnp.float32)
        return y * scale_b + shift_b

    def leaky(y):
        return jnp.where(y >= 0, y, NEG_SLOPE * y)

    def shifted_stack(y):
        # im2col for kernel=3 / pad=1: stack [y[l-1]; y[l]; y[l+1]] along the
        # channel axis, zeroing at every batch-segment seam (masks hoisted).
        n = y.shape[1]
        y_prev = pltpu.roll(y, shift=1, axis=1) * not_first       # y[l-1]
        y_next = pltpu.roll(y, shift=n - 1, axis=1) * not_last    # y[l+1]
        return jnp.concatenate([y_prev, y, y_next], axis=0)       # (3c, N)

    # ---- residual: AdaIN -> lrelu -> conv1(k3) -> AdaIN -> lrelu -> conv2(k3)
    y = leaky(adain(x, style1))
    y = jnp.dot(w1, shifted_stack(y).astype(mm_dtype),
                preferred_element_type=jnp.float32) + cb[:, 0:1]          # (Cout, N)

    y = leaky(adain(y, style2))
    # conv2 + learned 1x1 shortcut + /sqrt(2) fused into a single matmul.
    ys2 = jnp.concatenate([shifted_stack(y), x], axis=0).astype(mm_dtype)  # (3*Cout+Cin, N)
    out = jnp.dot(w2sc, ys2, preferred_element_type=jnp.float32) + cb[:, 1:2]

    o_ref[...] = out.astype(o_ref.dtype)


# ------------------------------ python wrapper -----------------------------

def _style_linear(s, w, b):
    # AdaIN fc; same helper used by kernel wrapper and the reference.
    return jnp.matmul(s, w.T, precision=lax.Precision.HIGHEST) + b


def adain_resblk1d(x, s, params, *, batch_block=None, use_bf16=False):
    """x: (B, dim_in, L) f32; s: (B, style_dim) f32 -> (B, dim_out, L)."""
    B, dim_in, L = x.shape
    dim_out = params["conv1_w"].shape[0]
    f32 = jnp.float32
    mm_dtype = jnp.bfloat16 if use_bf16 else f32

    # How many batch elements to pack per grid step (lane packing).  Prefer a
    # wide lane extent; if the batch is tiled, blocks must stay lane-aligned.
    if batch_block is None:
        batch_block = B
        target = max(1, 2048 // max(L, 1))
        for cand in range(min(B, target), 0, -1):
            if B % cand == 0 and (cand == B or (cand * L) % 128 == 0):
                batch_block = cand
                break
    bb = batch_block
    assert B % bb == 0 and (bb == B or (bb * L) % 128 == 0)
    nb = B // bb
    N = bb * L

    # Layout plumbing (wrapper-side XLA): batch packed along lanes.
    x_packed = jnp.transpose(x, (1, 0, 2)).reshape(dim_in, B * L).astype(f32)

    # AdaIN style FCs for the whole batch, precomputed outside the kernel.
    h1 = _style_linear(s, params["fc1_w"], params["fc1_b"])   # (B, 2*dim_in)
    h2 = _style_linear(s, params["fc2_w"], params["fc2_b"])   # (B, 2*dim_out)

    def pack_style(h, c):
        st = jnp.concatenate([1.0 + h[:, :c], h[:, c:]], axis=1)            # (B, 2c)
        return st.reshape(nb, bb, 2 * c).transpose(0, 2, 1).astype(f32)     # (nb, 2c, bb)

    style1 = pack_style(h1, dim_in)
    style2 = pack_style(h2, dim_out)

    # Per-segment reduction/broadcast matrices + conv edge masks (hoisted).
    lane = jnp.arange(N, dtype=jnp.int32)
    onehot = (lane[:, None] // L ==
              jnp.arange(bb, dtype=jnp.int32)[None, :]).astype(f32)         # (N, bb)
    smean = onehot / float(L)
    not_first = (lane % L != 0).astype(f32)[None, :]
    not_last = (lane % L != L - 1).astype(f32)[None, :]
    sbx = jnp.concatenate([onehot.T, not_first, not_last], axis=0)          # (bb+2, N)

    # Fold / fuse weights (one-time parameter transform).
    def cat_taps(w):                      # (Cout, Cin, 3) -> (Cout, 3*Cin), tap-major
        return jnp.transpose(w, (0, 2, 1)).reshape(w.shape[0], 3 * w.shape[1])

    sc_w = params.get("sc_w")
    if sc_w is None:                      # identity shortcut when dim_in == dim_out
        sc_w = jnp.eye(dim_out, dim_in, dtype=f32)

    w1_cat = cat_taps(params["conv1_w"]).astype(mm_dtype)
    w2sc = (jnp.concatenate([cat_taps(params["conv2_w"]), sc_w], axis=1)
            * INV_SQRT2).astype(mm_dtype)
    cbias = jnp.stack([params["conv1_b"], params["conv2_b"] * INV_SQRT2],
                      axis=1).astype(f32)                                   # (Cout, 2)

    full = lambda shape: pl.BlockSpec(shape, lambda g: (0,) * len(shape))

    out_packed = pl.pallas_call(
        adain_resblk_kernel,
        out_shape=jax.ShapeDtypeStruct((dim_out, B * L), x.dtype),
        grid_spec=pltpu.PrefetchScalarGridSpec(
            num_scalar_prefetch=0,
            grid=(nb,),
            in_specs=[
                pl.BlockSpec((dim_in, N), lambda g: (0, g)),              # x (lane-packed)
                full((N, bb)),                                            # smean
                full((bb + 2, N)),                                        # seg bcast + edge masks
                pl.BlockSpec((1, 2 * dim_in, bb), lambda g: (g, 0, 0)),   # style1
                pl.BlockSpec((1, 2 * dim_out, bb), lambda g: (g, 0, 0)),  # style2
                full((dim_out, 3 * dim_in)),                              # conv1 taps
                full((dim_out, 3 * dim_out + dim_in)),                    # conv2 taps | shortcut
                full((dim_out, 2)),                                       # biases
            ],
            out_specs=pl.BlockSpec((dim_out, N), lambda g: (0, g)),
        ),
        compiler_params=pltpu.CompilerParams(
            dimension_semantics=("parallel",)),
    )(x_packed, smean, sbx, style1, style2, w1_cat, w2sc, cbias)

    return out_packed.reshape(dim_out, B, L).transpose(1, 0, 2)


# --------------------------- parameter construction ------------------------

def _weight_norm(v, g):
    """PyTorch weight_norm, dim=0: w = g * v / ||v|| (norm over all non-0 dims)."""
    axes = tuple(range(1, v.ndim))
    norm = jnp.sqrt(jnp.sum(v * v, axis=axes, keepdims=True))
    g = g.reshape((-1,) + (1,) * (v.ndim - 1))
    return g * v / norm


def make_params(key, dim_in, dim_out, style_dim):
    ks = jax.random.split(key, 8)
    p = {}
    p["fc1_w"] = jax.random.normal(ks[0], (2 * dim_in, style_dim), jnp.float32) * 0.1
    p["fc1_b"] = jax.random.normal(ks[1], (2 * dim_in,), jnp.float32) * 0.1
    p["fc2_w"] = jax.random.normal(ks[2], (2 * dim_out, style_dim), jnp.float32) * 0.1
    p["fc2_b"] = jax.random.normal(ks[3], (2 * dim_out,), jnp.float32) * 0.1
    v1 = jax.random.normal(ks[4], (dim_out, dim_in, 3), jnp.float32) * 0.2
    p["conv1_w"] = _weight_norm(v1, jnp.ones((dim_out,), jnp.float32))
    p["conv1_b"] = jax.random.normal(ks[5], (dim_out,), jnp.float32) * 0.1
    v2 = jax.random.normal(ks[6], (dim_out, dim_out, 3), jnp.float32) * 0.2
    p["conv2_w"] = _weight_norm(v2, jnp.ones((dim_out,), jnp.float32))
    p["conv2_b"] = jax.random.normal(ks[7], (dim_out,), jnp.float32) * 0.1
    vsc = jax.random.normal(jax.random.fold_in(key, 99),
                            (dim_out, dim_in, 1), jnp.float32) * 0.2
    p["sc_w"] = _weight_norm(vsc, jnp.ones((dim_out,), jnp.float32))[:, :, 0]
    return p


# ------------------------------ pure-JAX reference -------------------------

def reference(x, s, params):
    def instnorm(z):
        m = z.mean(-1, keepdims=True)
        v = ((z - m) ** 2).mean(-1, keepdims=True)
        return (z - m) / jnp.sqrt(v + EPS)

    def leaky(z):
        return jnp.where(z >= 0, z, NEG_SLOPE * z)

    def conv1d(z, w, b, pad):
        out = lax.conv_general_dilated(
            z, w, window_strides=(1,), padding=[(pad, pad)],
            dimension_numbers=("NCH", "OIH", "NCH"),
            precision=lax.Precision.HIGHEST)
        return out + b[None, :, None]

    dim_in = x.shape[1]
    dim_out = params["conv1_w"].shape[0]

    h1 = _style_linear(s, params["fc1_w"], params["fc1_b"])
    g1, b1 = h1[:, :dim_in], h1[:, dim_in:]
    y = (1 + g1[:, :, None]) * instnorm(x) + b1[:, :, None]
    y = leaky(y)
    y = conv1d(y, params["conv1_w"], params["conv1_b"], 1)

    h2 = _style_linear(s, params["fc2_w"], params["fc2_b"])
    g2, b2 = h2[:, :dim_out], h2[:, dim_out:]
    y = (1 + g2[:, :, None]) * instnorm(y) + b2[:, :, None]
    y = leaky(y)
    y = conv1d(y, params["conv2_w"], params["conv2_b"], 1)

    x_sc = jnp.einsum("oi,bil->bol", params["sc_w"], x,
                      precision=lax.Precision.HIGHEST)
    return (y + x_sc) / math.sqrt(2.0)


# ----------------------------------- main ----------------------------------

if __name__ == "__main__":
    B, dim_in, dim_out, style_dim, L = 2, 8, 16, 64, 128

    key = jax.random.PRNGKey(0)
    kx, ks, kp = jax.random.split(key, 3)
    x = jax.random.normal(kx, (B, dim_in, L), jnp.float32)
    s = jax.random.normal(ks, (B, style_dim), jnp.float32)
    params = make_params(kp, dim_in, dim_out, style_dim)

    ref = jax.block_until_ready(reference(x, s, params))

    # f32 MXU path: the tight correctness gate.
    out = jax.block_until_ready(adain_resblk1d(x, s, params))
    assert out.shape == (B, dim_out, L), out.shape
    err = float(jnp.max(jnp.abs(out - ref)))
    assert jnp.allclose(out, ref, rtol=2e-3, atol=2e-3), err

    # bf16 MXU-operand path (fast path on v6e/v7x); norms/elementwise stay f32,
    # so ~2-3 decimal digits of matmul precision are expected -> loose gate.
    out_bf = jax.block_until_ready(adain_resblk1d(x, s, params, use_bf16=True))
    err_bf = float(jnp.max(jnp.abs(out_bf - ref)))
    assert err_bf < 0.2, err_bf

    print("KERNEL_OK")
</pallas_src>

<mosaic_0001>
module attributes {stable_mosaic.version = 11 : i64} {
  func.func @adain_resblk_kernel(%arg0: i32, %arg1: memref<8x256xf32, #tpu.memory_space<vmem>>, %arg2: memref<256x2xf32, #tpu.memory_space<vmem>>, %arg3: memref<4x256xf32, #tpu.memory_space<vmem>>, %arg4: memref<1x16x2xf32, #tpu.memory_space<vmem>>, %arg5: memref<1x32x2xf32, #tpu.memory_space<vmem>>, %arg6: memref<16x24xf32, #tpu.memory_space<vmem>>, %arg7: memref<16x56xf32, #tpu.memory_space<vmem>>, %arg8: memref<16x2xf32, #tpu.memory_space<vmem>>, %arg9: memref<16x256xf32, #tpu.memory_space<vmem>>) attributes {dimension_semantics = [#tpu.dimension_semantics<parallel>], iteration_bounds = array<i64: 1>, scalar_prefetch = 0 : i64, scratch_operands = 0 : i64, tpu.core_type = #tpu.core_type<tc>, window_params = [{transform_indices = @transform_0, window_bounds = array<i64: 8, 256>}, {pipeline_mode = #tpu.pipeline_mode<synchronous>, transform_indices = @transform_1, window_bounds = array<i64: 256, 2>}, {pipeline_mode = #tpu.pipeline_mode<synchronous>, transform_indices = @transform_2, window_bounds = array<i64: 4, 256>}, {transform_indices = @transform_3, window_bounds = array<i64: 1, 16, 2>}, {transform_indices = @transform_4, window_bounds = array<i64: 1, 32, 2>}, {pipeline_mode = #tpu.pipeline_mode<synchronous>, transform_indices = @transform_5, window_bounds = array<i64: 16, 24>}, {pipeline_mode = #tpu.pipeline_mode<synchronous>, transform_indices = @transform_6, window_bounds = array<i64: 16, 56>}, {pipeline_mode = #tpu.pipeline_mode<synchronous>, transform_indices = @transform_7, window_bounds = array<i64: 16, 2>}, {transform_indices = @transform_8, window_bounds = array<i64: 16, 256>}]} {
    %c0 = arith.constant 0 : index
    %c0_0 = arith.constant 0 : index
    %0 = vector.load %arg1[%c0, %c0_0] : memref<8x256xf32, #tpu.memory_space<vmem>>, vector<8x256xf32>
    %c0_1 = arith.constant 0 : index
    %c0_2 = arith.constant 0 : index
    %1 = vector.load %arg2[%c0_1, %c0_2] : memref<256x2xf32, #tpu.memory_space<vmem>>, vector<256x2xf32>
    %c0_3 = arith.constant 0 : index
    %c0_4 = arith.constant 0 : index
    %2 = vector.load %arg3[%c0_3, %c0_4] : memref<4x256xf32, #tpu.memory_space<vmem>>, vector<4x256xf32>
    %3 = vector.extract_strided_slice %2 {offsets = [0, 0], sizes = [2, 256], strides = [1, 1]} : vector<4x256xf32> to vector<2x256xf32>
    %4 = vector.extract_strided_slice %2 {offsets = [2, 0], sizes = [1, 256], strides = [1, 1]} : vector<4x256xf32> to vector<1x256xf32>
    %5 = vector.extract_strided_slice %2 {offsets = [3, 0], sizes = [1, 256], strides = [1, 1]} : vector<4x256xf32> to vector<1x256xf32>
    %c0_5 = arith.constant 0 : index
    %c0_6 = arith.constant 0 : index
    %c0_7 = arith.constant 0 : index
    %6 = vector.load %arg4[%c0_5, %c0_6, %c0_7] : memref<1x16x2xf32, #tpu.memory_space<vmem>>, vector<1x16x2xf32>
    %7 = vector.shape_cast %6 : vector<1x16x2xf32> to vector<16x2xf32>
    %c0_8 = arith.constant 0 : index
    %c0_9 = arith.constant 0 : index
    %c0_10 = arith.constant 0 : index
    %8 = vector.load %arg5[%c0_8, %c0_9, %c0_10] : memref<1x32x2xf32, #tpu.memory_space<vmem>>, vector<1x32x2xf32>
    %9 = vector.shape_cast %8 : vector<1x32x2xf32> to vector<32x2xf32>
    %c0_11 = arith.constant 0 : index
    %c0_12 = arith.constant 0 : index
    %10 = vector.load %arg6[%c0_11, %c0_12] : memref<16x24xf32, #tpu.memory_space<vmem>>, vector<16x24xf32>
    %c0_13 = arith.constant 0 : index
    %c0_14 = arith.constant 0 : index
    %11 = vector.load %arg7[%c0_13, %c0_14] : memref<16x56xf32, #tpu.memory_space<vmem>>, vector<16x56xf32>
    %c0_15 = arith.constant 0 : index
    %c0_16 = arith.constant 0 : index
    %12 = vector.load %arg8[%c0_15, %c0_16] : memref<16x2xf32, #tpu.memory_space<vmem>>, vector<16x2xf32>
    %cst = arith.constant dense<0.000000e+00> : vector<8x2xf32>
    %13 = tpu.matmul %0, %1, %cst {dimension_numbers = #tpu.dot_dimension_numbers<[1], [0], [0], [1], [0, 0, 1, 1], [], []>} : vector<8x256xf32>, vector<256x2xf32>, vector<8x2xf32> -> vector<8x2xf32>
    %14 = arith.mulf %0, %0 : vector<8x256xf32>
    %cst_17 = arith.constant dense<0.000000e+00> : vector<8x2xf32>
    %15 = tpu.matmul %14, %1, %cst_17 {dimension_numbers = #tpu.dot_dimension_numbers<[1], [0], [0], [1], [0, 0, 1, 1], [], []>} : vector<8x256xf32>, vector<256x2xf32>, vector<8x2xf32> -> vector<8x2xf32>
    %16 = arith.mulf %13, %13 : vector<8x2xf32>
    %17 = arith.subf %15, %16 : vector<8x2xf32>
    %cst_18 = arith.constant 9.99999974E-6 : f32
    %18 = vector.broadcast %cst_18 : f32 to vector<8x2xf32>
    %19 = arith.addf %17, %18 : vector<8x2xf32>
    %20 = math.rsqrt %19 : vector<8x2xf32>
    %21 = vector.extract_strided_slice %7 {offsets = [0, 0], sizes = [8, 2], strides = [1, 1]} : vector<16x2xf32> to vector<8x2xf32>
    %22 = arith.mulf %21, %20 : vector<8x2xf32>
    %23 = vector.extract_strided_slice %7 {offsets = [8, 0], sizes = [8, 2], strides = [1, 1]} : vector<16x2xf32> to vector<8x2xf32>
    %24 = arith.mulf %22, %13 : vector<8x2xf32>
    %25 = arith.subf %23, %24 : vector<8x2xf32>
    %cst_19 = arith.constant dense<0.000000e+00> : vector<8x256xf32>
    %26 = tpu.matmul %22, %3, %cst_19 {dimension_numbers = #tpu.dot_dimension_numbers<[1], [0], [0], [1], [0, 0, 1, 1], [], []>} : vector<8x2xf32>, vector<2x256xf32>, vector<8x256xf32> -> vector<8x256xf32>
    %cst_20 = arith.constant dense<0.000000e+00> : vector<8x256xf32>
    %27 = tpu.matmul %25, %3, %cst_20 {dimension_numbers = #tpu.dot_dimension_numbers<[1], [0], [0], [1], [0, 0, 1, 1], [], []>} : vector<8x2xf32>, vector<2x256xf32>, vector<8x256xf32> -> vector<8x256xf32>
    %28 = arith.mulf %0, %26 : vector<8x256xf32>
    %29 = arith.addf %28, %27 : vector<8x256xf32>
    %cst_21 = arith.constant 0.000000e+00 : f32
    %30 = vector.broadcast %cst_21 : f32 to vector<8x256xf32>
    %31 = arith.cmpf oge, %29, %30 : vector<8x256xf32>
    %cst_22 = arith.constant 2.000000e-01 : f32
    %32 = vector.broadcast %cst_22 : f32 to vector<8x256xf32>
    %33 = arith.mulf %32, %29 : vector<8x256xf32>
    %34 = arith.select %31, %29, %33 : vector<8x256xi1>, vector<8x256xf32>
    %c1_i32 = arith.constant 1 : i32
    %35 = tpu.dynamic_rotate %34 by %c1_i32 dim 1 : vector<8x256xf32>, i32 -> vector<8x256xf32>
    %36 = vector.broadcast %4 : vector<1x256xf32> to vector<8x256xf32>
    %37 = arith.mulf %35, %36 : vector<8x256xf32>
    %c255_i32 = arith.constant 255 : i32
    %38 = tpu.dynamic_rotate %34 by %c255_i32 dim 1 : vector<8x256xf32>, i32 -> vector<8x256xf32>
    %39 = vector.broadcast %5 : vector<1x256xf32> to vector<8x256xf32>
    %40 = arith.mulf %38, %39 : vector<8x256xf32>
    %41 = tpu.concatenate %37, %34, %40 in 0 : vector<8x256xf32>, vector<8x256xf32>, vector<8x256xf32> -> vector<24x256xf32>
    %cst_23 = arith.constant dense<0.000000e+00> : vector<16x256xf32>
    %42 = tpu.matmul %10, %41, %cst_23 {dimension_numbers = #tpu.dot_dimension_numbers<[1], [0], [0], [1], [0, 0, 1, 1], [], []>} : vector<16x24xf32>, vector<24x256xf32>, vector<16x256xf32> -> vector<16x256xf32>
    %43 = vector.extract_strided_slice %12 {offsets = [0, 0], sizes = [16, 1], strides = [1, 1]} : vector<16x2xf32> to vector<16x1xf32>
    %44 = vector.broadcast %43 : vector<16x1xf32> to vector<16x256xf32>
    %45 = arith.addf %42, %44 : vector<16x256xf32>
    %cst_24 = arith.constant dense<0.000000e+00> : vector<16x2xf32>
    %46 = tpu.matmul %45, %1, %cst_24 {dimension_numbers = #tpu.dot_dimension_numbers<[1], [0], [0], [1], [0, 0, 1, 1], [], []>} : vector<16x256xf32>, vector<256x2xf32>, vector<16x2xf32> -> vector<16x2xf32>
    %47 = arith.mulf %45, %45 : vector<16x256xf32>
    %cst_25 = arith.constant dense<0.000000e+00> : vector<16x2xf32>
    %48 = tpu.matmul %47, %1, %cst_25 {dimension_numbers = #tpu.dot_dimension_numbers<[1], [0], [0], [1], [0, 0, 1, 1], [], []>} : vector<16x256xf32>, vector<256x2xf32>, vector<16x2xf32> -> vector<16x2xf32>
    %49 = arith.mulf %46, %46 : vector<16x2xf32>
    %50 = arith.subf %48, %49 : vector<16x2xf32>
    %cst_26 = arith.constant 9.99999974E-6 : f32
    %51 = vector.broadcast %cst_26 : f32 to vector<16x2xf32>
    %52 = arith.addf %50, %51 : vector<16x2xf32>
    %53 = math.rsqrt %52 : vector<16x2xf32>
    %54 = vector.extract_strided_slice %9 {offsets = [0, 0], sizes = [16, 2], strides = [1, 1]} : vector<32x2xf32> to vector<16x2xf32>
    %55 = arith.mulf %54, %53 : vector<16x2xf32>
    %56 = vector.extract_strided_slice %9 {offsets = [16, 0], sizes = [16, 2], strides = [1, 1]} : vector<32x2xf32> to vector<16x2xf32>
    %57 = arith.mulf %55, %46 : vector<16x2xf32>
    %58 = arith.subf %56, %57 : vector<16x2xf32>
    %cst_27 = arith.constant dense<0.000000e+00> : vector<16x256xf32>
    %59 = tpu.matmul %55, %3, %cst_27 {dimension_numbers = #tpu.dot_dimension_numbers<[1], [0], [0], [1], [0, 0, 1, 1], [], []>} : vector<16x2xf32>, vector<2x256xf32>, vector<16x256xf32> -> vector<16x256xf32>
    %cst_28 = arith.constant dense<0.000000e+00> : vector<16x256xf32>
    %60 = tpu.matmul %58, %3, %cst_28 {dimension_numbers = #tpu.dot_dimension_numbers<[1], [0], [0], [1], [0, 0, 1, 1], [], []>} : vector<16x2xf32>, vector<2x256xf32>, vector<16x256xf32> -> vector<16x256xf32>
    %61 = arith.mulf %45, %59 : vector<16x256xf32>
    %62 = arith.addf %61, %60 : vector<16x256xf32>
    %cst_29 = arith.constant 0.000000e+00 : f32
    %63 = vector.broadcast %cst_29 : f32 to vector<16x256xf32>
    %64 = arith.cmpf oge, %62, %63 : vector<16x256xf32>
    %cst_30 = arith.constant 2.000000e-01 : f32
    %65 = vector.broadcast %cst_30 : f32 to vector<16x256xf32>
    %66 = arith.mulf %65, %62 : vector<16x256xf32>
    %67 = arith.select %64, %62, %66 : vector<16x256xi1>, vector<16x256xf32>
    %c1_i32_31 = arith.constant 1 : i32
    %68 = tpu.dynamic_rotate %67 by %c1_i32_31 dim 1 : vector<16x256xf32>, i32 -> vector<16x256xf32>
    %69 = vector.broadcast %4 : vector<1x256xf32> to vector<16x256xf32>
    %70 = arith.mulf %68, %69 : vector<16x256xf32>
    %c255_i32_32 = arith.constant 255 : i32
    %71 = tpu.dynamic_rotate %67 by %c255_i32_32 dim 1 : vector<16x256xf32>, i32 -> vector<16x256xf32>
    %72 = vector.broadcast %5 : vector<1x256xf32> to vector<16x256xf32>
    %73 = arith.mulf %71, %72 : vector<16x256xf32>
    %74 = tpu.concatenate %70, %67, %73 in 0 : vector<16x256xf32>, vector<16x256xf32>, vector<16x256xf32> -> vector<48x256xf32>
    %75 = tpu.concatenate %74, %0 in 0 : vector<48x256xf32>, vector<8x256xf32> -> vector<56x256xf32>
    %cst_33 = arith.constant dense<0.000000e+00> : vector<16x256xf32>
    %76 = tpu.matmul %11, %75, %cst_33 {dimension_numbers = #tpu.dot_dimension_numbers<[1], [0], [0], [1], [0, 0, 1, 1], [], []>} : vector<16x56xf32>, vector<56x256xf32>, vector<16x256xf32> -> vector<16x256xf32>
    %77 = vector.extract_strided_slice %12 {offsets = [0, 1], sizes = [16, 1], strides = [1, 1]} : vector<16x2xf32> to vector<16x1xf32>
    %78 = vector.broadcast %77 : vector<16x1xf32> to vector<16x256xf32>
    %79 = arith.addf %76, %78 : vector<16x256xf32>
    %c0_34 = arith.constant 0 : index
    %c0_35 = arith.constant 0 : index
    %80 = vector.load %arg9[%c0_34, %c0_35] : memref<16x256xf32, #tpu.memory_space<vmem>>, vector<16x256xf32>
    tpu.vector_store %arg9[%c0_34, %c0_35], %79 {strides = array<i32>} : memref<16x256xf32, #tpu.memory_space<vmem>>, vector<16x256xf32>,
    return
  }
  func.func @transform_0(%arg0: i32) -> (i32, i32) {
    %c0_i32 = arith.constant 0 : i32
    %c0_i32_0 = arith.constant 0 : i32
    return %c0_i32, %arg0 : i32, i32
  }
  func.func @transform_1(%arg0: i32) -> (i32, i32) {
    %c0_i32 = arith.constant 0 : i32
    %c0_i32_0 = arith.constant 0 : i32
    %c0_i32_1 = arith.constant 0 : i32
    return %c0_i32, %c0_i32_0 : i32, i32
  }
  func.func @transform_2(%arg0: i32) -> (i32, i32) {
    %c0_i32 = arith.constant 0 : i32
    %c0_i32_0 = arith.constant 0 : i32
    %c0_i32_1 = arith.constant 0 : i32
    return %c0_i32, %c0_i32_0 : i32, i32
  }
  func.func @transform_3(%arg0: i32) -> (i32, i32, i32) {
    %c0_i32 = arith.constant 0 : i32
    %c0_i32_0 = arith.constant 0 : i32
    %c0_i32_1 = arith.constant 0 : i32
    return %arg0, %c0_i32, %c0_i32_0 : i32, i32, i32
  }
  func.func @transform_4(%arg0: i32) -> (i32, i32, i32) {
    %c0_i32 = arith.constant 0 : i32
    %c0_i32_0 = arith.constant 0 : i32
    %c0_i32_1 = arith.constant 0 : i32
    return %arg0, %c0_i32, %c0_i32_0 : i32, i32, i32
  }
  func.func @transform_5(%arg0: i32) -> (i32, i32) {
    %c0_i32 = arith.constant 0 : i32
    %c0_i32_0 = arith.constant 0 : i32
    %c0_i32_1 = arith.constant 0 : i32
    return %c0_i32, %c0_i32_0 : i32, i32
  }
  func.func @transform_6(%arg0: i32) -> (i32, i32) {
    %c0_i32 = arith.constant 0 : i32
    %c0_i32_0 = arith.constant 0 : i32
    %c0_i32_1 = arith.constant 0 : i32
    return %c0_i32, %c0_i32_0 : i32, i32
  }
  func.func @transform_7(%arg0: i32) -> (i32, i32) {
    %c0_i32 = arith.constant 0 : i32
    %c0_i32_0 = arith.constant 0 : i32
    %c0_i32_1 = arith.constant 0 : i32
    return %c0_i32, %c0_i32_0 : i32, i32
  }
  func.func @transform_8(%arg0: i32) -> (i32, i32) {
    %c0_i32 = arith.constant 0 : i32
    %c0_i32_0 = arith.constant 0 : i32
    return %c0_i32, %arg0 : i32, i32
  }
}

</mosaic_0001>

<llo_original>
// kernel: tpu_custom_call.1
$region0: #{tpu_custom_call.1}
  #allocation0 [shape = 'u32[]', space=smem, size = 0x4, offset = 0x4, fixed_abs, tag = 'smem constant byte address 0x4 - core index']
  #allocation1 [shape = 'u32[72,128]{1,0:T(1,128)}', space=vmem, size = 0x9000, scoped, tag = 'internal scratch']
  %s0 = inlined_call_operand.vmem [shape: f32[8,256], index: 0, kind: input, shape index: {}]
  %s1 = inlined_call_operand.vmem [shape: f32[256,2], index: 1, kind: input, shape index: {}]
  %s2 = inlined_call_operand.vmem [shape: f32[4,256], index: 2, kind: input, shape index: {}]
  %s3 = inlined_call_operand.vmem [shape: f32[1,16,2], index: 3, kind: input, shape index: {}]
  %s4 = inlined_call_operand.vmem [shape: f32[1,32,2], index: 4, kind: input, shape index: {}]
  %s5 = inlined_call_operand.vmem [shape: f32[16,24], index: 5, kind: input, shape index: {}]
  %s6 = inlined_call_operand.vmem [shape: f32[16,56], index: 6, kind: input, shape index: {}]
  %s7 = inlined_call_operand.vmem [shape: f32[16,2], index: 7, kind: input, shape index: {}]
  %s8 = inlined_call_operand.hbm [shape: f32[16,256], index: 8, kind: output, shape index: {}]
  %s9 = sld [smem:[#allocation0]]
  $region42: #{tpu_custom_call.1} parent=0
    _
  %s11 = ssub.s32 1, %s9
  %s12 = scalar_select 0, %s11, %s9
  $region1: #{tpu_custom_call.1} parent=0
    #allocation2 [shape = 'u8[16384]{0}', space=vmem, size = 0x4000, scoped, tag = 'output window, operand 0, single buffered']
    #allocation3 [shape = 's32[1]{0}', space=sflag, size = 0x4, scoped, tag = 'scoped memory for tpu_custom_call.1']
    %13 = vsyncpa [#allocation3], 0
    // Predicated region
    $region2: #{tpu_custom_call.1} parent=1 // pred_check
      _
    $region3: #{tpu_custom_call.1} parent=1 // pred_check_branch
      %15 = sbr.rel (0) target = $region5
    $region4: #{tpu_custom_call.1} parent=1 // pred_region
      _
    $region5: #{tpu_custom_call.1} parent=1 // pred_fallthru
      _
    // Predicated region
    $region6: #{tpu_custom_call.1} parent=1 // pred_check
      _
    $region7: #{tpu_custom_call.1} parent=1 // pred_check_branch
      %17 = sbr.rel (0) target = $region9
    $region8: #{tpu_custom_call.1} parent=1 // pred_region
      _
    $region9: #{tpu_custom_call.1} parent=1 // pred_fallthru
      _
    // Predicated region
    $region10: #{tpu_custom_call.1} parent=1 // pred_check
      _
    $region11: #{tpu_custom_call.1} parent=1 // pred_check_branch
      %19 = sbr.rel (0) target = $region13
    $region12: #{tpu_custom_call.1} parent=1 // pred_region
      _
    $region13: #{tpu_custom_call.1} parent=1 // pred_fallthru
      _
    // Predicated region
    $region14: #{tpu_custom_call.1} parent=1 // pred_check
      _
    $region15: #{tpu_custom_call.1} parent=1 // pred_check_branch
      %21 = sbr.rel (0) target = $region17
    $region16: #{tpu_custom_call.1} parent=1 // pred_region
      _
    $region17: #{tpu_custom_call.1} parent=1 // pred_fallthru
      _
    // Predicated region
    $region18: #{tpu_custom_call.1} parent=1 // pred_check
      _
    $region19: #{tpu_custom_call.1} parent=1 // pred_check_branch
      %23 = sbr.rel (0) target = $region21
    $region20: #{tpu_custom_call.1} parent=1 // pred_region
      _
    $region21: #{tpu_custom_call.1} parent=1 // pred_fallthru
      _
    // Predicated region
    $region22: #{tpu_custom_call.1} parent=1 // pred_check
      _
    $region23: #{tpu_custom_call.1} parent=1 // pred_check_branch
      %25 = sbr.rel (0) target = $region25
    $region24: #{tpu_custom_call.1} parent=1 // pred_region
      _
    $region25: #{tpu_custom_call.1} parent=1 // pred_fallthru
      _
    // Predicated region
    $region26: #{tpu_custom_call.1} parent=1 // pred_check
      _
    $region27: #{tpu_custom_call.1} parent=1 // pred_check_branch
      %27 = sbr.rel (0) target = $region29
    $region28: #{tpu_custom_call.1} parent=1 // pred_region
      _
    $region29: #{tpu_custom_call.1} parent=1 // pred_fallthru
      _
    // Predicated region
    $region30: #{tpu_custom_call.1} parent=1 // pred_check
      _
    $region31: #{tpu_custom_call.1} parent=1 // pred_check_branch
      %29 = sbr.rel (0) target = $region33
    $region32: #{tpu_custom_call.1} parent=1 // pred_region
      _
    $region33: #{tpu_custom_call.1} parent=1 // pred_fallthru
      _
    %v30 = vld [vmem:[%s0] sm:$0xff]
    %v31 = vld [vmem:[%s0 + $0x8] sm:$0xff]
    %v32 = vld [vmem:[%s1] sm:$0xff]
    %v33 = vld [vmem:[%s1 + $0x8] sm:$0xff]
    %v34 = vld [vmem:[%s1 + $0x10] sm:$0xff]
    %v35 = vld [vmem:[%s1 + $0x18] sm:$0xff]
    %v36 = vld [vmem:[%s1 + $0x20] sm:$0xff]
    %v37 = vld [vmem:[%s1 + $0x28] sm:$0xff]
    %v38 = vld [vmem:[%s1 + $0x30] sm:$0xff]
    %v39 = vld [vmem:[%s1 + $0x38] sm:$0xff]
    %v40 = vld [vmem:[%s1 + $0x40] sm:$0xff]
    %v41 = vld [vmem:[%s1 + $0x48] sm:$0xff]
    %v42 = vld [vmem:[%s1 + $0x50] sm:$0xff]
    %v43 = vld [vmem:[%s1 + $0x58] sm:$0xff]
    %v44 = vld [vmem:[%s1 + $0x60] sm:$0xff]
    %v45 = vld [vmem:[%s1 + $0x68] sm:$0xff]
    %v46 = vld [vmem:[%s1 + $0x70] sm:$0xff]
    %v47 = vld [vmem:[%s1 + $0x78] sm:$0xff]
    %v48 = vld [vmem:[%s1 + $0x80] sm:$0xff]
    %v49 = vld [vmem:[%s1 + $0x88] sm:$0xff]
    %v50 = vld [vmem:[%s1 + $0x90] sm:$0xff]
    %v51 = vld [vmem:[%s1 + $0x98] sm:$0xff]
    %v52 = vld [vmem:[%s1 + $0xa0] sm:$0xff]
    %v53 = vld [vmem:[%s1 + $0xa8] sm:$0xff]
    %v54 = vld [vmem:[%s1 + $0xb0] sm:$0xff]
    %v55 = vld [vmem:[%s1 + $0xb8] sm:$0xff]
    %v56 = vld [vmem:[%s1 + $0xc0] sm:$0xff]
    %v57 = vld [vmem:[%s1 + $0xc8] sm:$0xff]
    %v58 = vld [vmem:[%s1 + $0xd0] sm:$0xff]
    %v59 = vld [vmem:[%s1 + $0xd8] sm:$0xff]
    %v60 = vld [vmem:[%s1 + $0xe0] sm:$0xff]
    %v61 = vld [vmem:[%s1 + $0xe8] sm:$0xff]
    %v62 = vld [vmem:[%s1 + $0xf0] sm:$0xff]
    %v63 = vld [vmem:[%s1 + $0xf8] sm:$0xff]
    %v64 = vld [vmem:[%s2] sm:$0xff]
    %v65 = vld [vmem:[%s3] sm:$0xff]
    %v66 = vld [vmem:[%s3 + $0x8] sm:$0xff]
    %v67 = vld [vmem:[%s4] sm:$0xff]
    %v68 = vld [vmem:[%s4 + $0x8] sm:$0xff]
    %v69 = vld [vmem:[%s4 + $0x10] sm:$0xff]
    %v70 = vld [vmem:[%s4 + $0x18] sm:$0xff]
    %v71 = vld [vmem:[%s5] sm:$0xff]
    %v72 = vld [vmem:[%s5 + $0x8] sm:$0xff]
    %v73 = vld [vmem:[%s6] sm:$0xff]
    %v74 = vld [vmem:[%s6 + $0x8] sm:$0xff]
    %v75 = vld [vmem:[%s7] sm:$0xff]
    %v76 = vld [vmem:[%s7 + $0x8] sm:$0xff]
    %77 = vmatpush.msra.mxu0 %v47
    %78 = vmatpush.msra.mxu0 %v46
    %79 = vmatpush.msra.mxu0 %v45
    %80 = vmatpush.msra.mxu0 %v44
    %81 = vmatpush.msra.mxu0 %v43
    %82 = vmatpush.msra.mxu0 %v42
    %83 = vmatpush.msra.mxu0 %v41
    %84 = vmatpush.msra.mxu0 %v40
    %85 = vmatpush.msra.mxu0 %v39
    %86 = vmatpush.msra.mxu0 %v38
    %87 = vmatpush.msra.mxu0 %v37
    %88 = vmatpush.msra.mxu0 %v36
    %89 = vmatpush.msra.mxu0 %v35
    %90 = vmatpush.msra.mxu0 %v34
    %91 = vmatpush.msra.mxu0 %v33
    %92 = vmatpush.msra.mxu0 %v32
    %93 = vmatmul.f32.gmra.mxu0 %v30
    %v94 = vpop.f32.mrf.mxu0
    %v95 = vadd.f32 0.0, %v94
    %96 = vdwg.mxu0
    %97 = vmatpush.msra.mxu0 %v63
    %98 = vmatpush.msra.mxu0 %v62
    %99 = vmatpush.msra.mxu0 %v61
    %100 = vmatpush.msra.mxu0 %v60
    %101 = vmatpush.msra.mxu0 %v59
    %102 = vmatpush.msra.mxu0 %v58
    %103 = vmatpush.msra.mxu0 %v57
    %104 = vmatpush.msra.mxu0 %v56
    %105 = vmatpush.msra.mxu0 %v55
    %106 = vmatpush.msra.mxu0 %v54
    %107 = vmatpush.msra.mxu0 %v53
    %108 = vmatpush.msra.mxu0 %v52
    %109 = vmatpush.msra.mxu0 %v51
    %110 = vmatpush.msra.mxu0 %v50
    %111 = vmatpush.msra.mxu0 %v49
    %112 = vmatpush.msra.mxu0 %v48
    %113 = vmatmul.f32.gmra.mxu0 %v31
    %v114 = vpop.f32.mrf.mxu0
    %v115 = vadd.f32 %v95, %v114
    %116 = vdwg.mxu0
    %v117 = vmul.f32 %v30, %v30
    %v118 = vmul.f32 %v31, %v31
    %119 = vmatpush.msra.mxu0 %v47
    %120 = vmatpush.msra.mxu0 %v46
    %121 = vmatpush.msra.mxu0 %v45
    %122 = vmatpush.msra.mxu0 %v44
    %123 = vmatpush.msra.mxu0 %v43
    %124 = vmatpush.msra.mxu0 %v42
    %125 = vmatpush.msra.mxu0 %v41
    %126 = vmatpush.msra.mxu0 %v40
    %127 = vmatpush.msra.mxu0 %v39
    %128 = vmatpush.msra.mxu0 %v38
    %129 = vmatpush.msra.mxu0 %v37
    %130 = vmatpush.msra.mxu0 %v36
    %131 = vmatpush.msra.mxu0 %v35
    %132 = vmatpush.msra.mxu0 %v34
    %133 = vmatpush.msra.mxu0 %v33
    %134 = vmatpush.msra.mxu0 %v32
    %135 = vmatmul.f32.gmra.mxu0 %v117
    %v136 = vpop.f32.mrf.mxu0
    %v137 = vadd.f32 0.0, %v136
    %138 = vdwg.mxu0
    %139 = vmatpush.msra.mxu0 %v63
    %140 = vmatpush.msra.mxu0 %v62
    %141 = vmatpush.msra.mxu0 %v61
    %142 = vmatpush.msra.mxu0 %v60
    %143 = vmatpush.msra.mxu0 %v59
    %144 = vmatpush.msra.mxu0 %v58
    %145 = vmatpush.msra.mxu0 %v57
    %146 = vmatpush.msra.mxu0 %v56
    %147 = vmatpush.msra.mxu0 %v55
    %148 = vmatpush.msra.mxu0 %v54
    %149 = vmatpush.msra.mxu0 %v53
    %150 = vmatpush.msra.mxu0 %v52
    %151 = vmatpush.msra.mxu0 %v51
    %152 = vmatpush.msra.mxu0 %v50
    %153 = vmatpush.msra.mxu0 %v49
    %154 = vmatpush.msra.mxu0 %v48
    %155 = vmatmul.f32.gmra.mxu0 %v118
    %v156 = vpop.f32.mrf.mxu0
    %v157 = vadd.f32 %v137, %v156
    %158 = vdwg.mxu0
    %v159 = vmul.f32 %v115, %v115
    %v160 = vsub.f32 %v157, %v159
    %v161 = vadd.f32 %v160, 1e-05
    %v162 = vrsqrt.pop %v161
    %v163 = vmul.f32 %v162, %v161
    %v164 = vmul.f32 %v163, %v162
    %v165 = vmul.f32 0.5, %v164
    %v166 = vsub.f32 1.5, %v165
    %v167 = vmul.f32 %v162, %v166
    %vm168 = vweird.f32 %v161
    %vm169 = vweird.f32 %v162
    %vm170 = vmor %vm168, %vm169
    %v171 = vsel %vm170, %v162, %v167
    %v172 = vmul.f32 %v65, %v171
    %v173 = vmul.f32 %v172, %v115
    %v174 = vsub.f32 %v66, %v173
    %176 = vst [vmem:[#allocation1] ss:$2 sm:$0xff] %v64
    %v177 = vld.sshfl [vmem:[#allocation1] sm:$0xff pattern:$0x75316420]
    %v178 = vld.sshfl [vmem:[#allocation1 + $0x8] sm:$0xff pattern:$0x75316420]
    %vm179 = vcmask 15360
    %v181 = vsel %vm179, %v172, 0
    %vm183 = vcmask 1041408
    %v184 = vsel %vm183, %v177, 0
    %v186 = vsel %vm183, %v178, 0
    %188 = vmatpush.msra.mxu0 0.0
    %189 = vmatpush.msra.mxu0 0.0
    %190 = vmatpush.msra.mxu0 0.0
    %191 = vmatpush.msra.mxu0 0.0
    %192 = vmatpush.msra.mxu0 0.0
    %193 = vmatpush.msra.mxu0 0.0
    %194 = vmatpush.msra.mxu0 0.0
    %195 = vmatpush.msra.mxu0 0.0
    %196 = vmatpush.msra.mxu0 0.0
    %197 = vmatpush.msra.mxu0 0.0
    %198 = vmatpush.msra.mxu0 0.0
    %199 = vmatpush.msra.mxu0 0.0
    %200 = vmatpush.msra.mxu0 0.0
    %201 = vmatpush.msra.mxu0 0.0
    %202 = vmatpush.msra.mxu0 0.0
    %203 = vmatpush.msra.mxu0 %v184
    %204 = vmatmul.f32.gmra.mxu0 %v181
    %v205 = vpop.f32.mrf.mxu0
    %v206 = vadd.f32 0.0, %v205
    %207 = vdwg.mxu0
    %208 = vmatpush.msra.mxu0 0.0
    %209 = vmatpush.msra.mxu0 0.0
    %210 = vmatpush.msra.mxu0 0.0
    %211 = vmatpush.msra.mxu0 0.0
    %212 = vmatpush.msra.mxu0 0.0
    %213 = vmatpush.msra.mxu0 0.0
    %214 = vmatpush.msra.mxu0 0.0
    %215 = vmatpush.msra.mxu0 0.0
    %216 = vmatpush.msra.mxu0 0.0
    %217 = vmatpush.msra.mxu0 0.0
    %218 = vmatpush.msra.mxu0 0.0
    %219 = vmatpush.msra.mxu0 0.0
    %220 = vmatpush.msra.mxu0 0.0
    %221 = vmatpush.msra.mxu0 0.0
    %222 = vmatpush.msra.mxu0 0.0
    %223 = vmatpush.msra.mxu0 %v186
    %224 = vmatmul.f32.gmra.mxu0 %v181
    %v225 = vpop.f32.mrf.mxu0
    %v226 = vadd.f32 0.0, %v225
    %227 = vdwg.mxu0
    %228 = vst [vmem:[#allocation1] ss:$2 sm:$0xff] %v64
    %v229 = vld.sshfl [vmem:[#allocation1] sm:$0xff pattern:$0x75316420]
    %v230 = vld.sshfl [vmem:[#allocation1 + $0x8] sm:$0xff pattern:$0x75316420]
    %v232 = vsel %vm179, %v174, 0
    %v234 = vsel %vm183, %v229, 0
    %v236 = vsel %vm183, %v230, 0
    %238 = vmatpush.msra.mxu0 0.0
    %239 = vmatpush.msra.mxu0 0.0
    %240 = vmatpush.msra.mxu0 0.0
    %241 = vmatpush.msra.mxu0 0.0
    %242 = vmatpush.msra.mxu0 0.0
    %243 = vmatpush.msra.mxu0 0.0
    %244 = vmatpush.msra.mxu0 0.0
    %245 = vmatpush.msra.mxu0 0.0
    %246 = vmatpush.msra.mxu0 0.0
    %247 = vmatpush.msra.mxu0 0.0
    %248 = vmatpush.msra.mxu0 0.0
    %249 = vmatpush.msra.mxu0 0.0
    %250 = vmatpush.msra.mxu0 0.0
    %251 = vmatpush.msra.mxu0 0.0
    %252 = vmatpush.msra.mxu0 0.0
    %253 = vmatpush.msra.mxu0 %v234
    %254 = vmatmul.f32.gmra.mxu0 %v232
    %v255 = vpop.f32.mrf.mxu0
    %v256 = vadd.f32 0.0, %v255
    %257 = vdwg.mxu0
    %258 = vmatpush.msra.mxu0 0.0
    %259 = vmatpush.msra.mxu0 0.0
    %260 = vmatpush.msra.mxu0 0.0
    %261 = vmatpush.msra.mxu0 0.0
    %262 = vmatpush.msra.mxu0 0.0
    %263 = vmatpush.msra.mxu0 0.0
    %264 = vmatpush.msra.mxu0 0.0
    %265 = vmatpush.msra.mxu0 0.0
    %266 = vmatpush.msra.mxu0 0.0
    %267 = vmatpush.msra.mxu0 0.0
    %268 = vmatpush.msra.mxu0 0.0
    %269 = vmatpush.msra.mxu0 0.0
    %270 = vmatpush.msra.mxu0 0.0
    %271 = vmatpush.msra.mxu0 0.0
    %272 = vmatpush.msra.mxu0 0.0
    %273 = vmatpush.msra.mxu0 %v236
    %274 = vmatmul.f32.gmra.mxu0 %v232
    %v275 = vpop.f32.mrf.mxu0
    %v276 = vadd.f32 0.0, %v275
    %277 = vdwg.mxu0
    %v278 = vmul.f32 %v30, %v206
    %v279 = vmul.f32 %v31, %v226
    %v280 = vadd.f32 %v278, %v256
    %v281 = vadd.f32 %v279, %v276
    %vm282 = vcmp.ge.f32.partialorder %v280, 0.0
    %vm283 = vcmp.ge.f32.partialorder %v281, 0.0
    %v284 = vmul.f32 %v280, 0.2
    %v285 = vmul.f32 %v281, 0.2
    %v286 = vsel %vm282, %v280, %v284
    %v287 = vsel %vm283, %v281, %v285
    %288 = vrot.lane.b32.xlu0 %v286, 1
    %v289 = vpop.permute.xlu0 %288
    %290 = vrot.lane.b32.xlu0 %v287, 1
    %v291 = vpop.permute.xlu0 %290
    %v292 = vlaneseq
    %v293 = vand.u32 %v292, 127
    %vm294 = vcmp.lt.s32.totalorder %v293, 1
    %v295 = vsel %vm294, %v289, %v291
    %v296 = vsel %vm294, %v291, %v289
    %v297 = vperm.slane %v64, 2
    %v298 = vperm.slane %v64, 6
    %v301 = vperm.slane %v297, 2
    %v302 = vperm.slane %v298, 2
    %v303 = vmul.f32 %v296, %v301
    %v304 = vmul.f32 %v295, %v302
    %305 = vrot.lane.b32.xlu0 %v286, 127
    %v306 = vpop.permute.xlu0 %305
    %307 = vrot.lane.b32.xlu0 %v287, 127
    %v308 = vpop.permute.xlu0 %307
    %vm309 = vcmp.lt.s32.totalorder %v293, 127
    %v310 = vsel %vm309, %v306, %v308
    %v311 = vsel %vm309, %v308, %v306
    %v312 = vperm.slane %v64, 3
    %v313 = vperm.slane %v64, 7
    %v316 = vperm.slane %v312, 3
    %v317 = vperm.slane %v313, 3
    %v318 = vmul.f32 %v310, %v316
    %v319 = vmul.f32 %v311, %v317
    %321 = vset.pattern.permute.xlu0 0
    %322 = vperm.xlu0 %321, %v75
    %v323 = vpop.permute.xlu0 %322
    %326 = vset.pattern.permute.xlu0 0
    %327 = vperm.xlu0 %326, %v76
    %v328 = vpop.permute.xlu0 %327
    %vm330 = vcmask 195584
    %v332 = vsel %vm330, %v71, 0
    %v335 = vsel %vm330, %v72, 0
    %337 = vmatpush.msra.mxu0 0.0
    %338 = vmatpush.msra.mxu0 0.0
    %339 = vmatpush.msra.mxu0 0.0
    %340 = vmatpush.msra.mxu0 0.0
    %341 = vmatpush.msra.mxu0 0.0
    %342 = vmatpush.msra.mxu0 0.0
    %343 = vmatpush.msra.mxu0 0.0
    %344 = vmatpush.msra.mxu0 0.0
    %345 = vmatpush.msra.mxu0 0.0
    %346 = vmatpush.msra.mxu0 0.0
    %347 = vmatpush.msra.mxu0 0.0
    %348 = vmatpush.msra.mxu0 0.0
    %349 = vmatpush.msra.mxu0 0.0
    %350 = vmatpush.msra.mxu0 %v318
    %351 = vmatpush.msra.mxu0 %v286
    %352 = vmatpush.msra.mxu0 %v303
    %353 = vmatmul.f32.gmra.mxu0 %v332
    %v354 = vpop.f32.mrf.mxu0
    %v355 = vadd.f32 %v323, %v354
    %356 = vmatmul.f32.gmra.mxu0 %v335
    %v357 = vpop.f32.mrf.mxu0
    %v358 = vadd.f32 %v328, %v357
    %359 = vdwg.mxu0
    %360 = vmatpush.msra.mxu0 0.0
    %361 = vmatpush.msra.mxu0 0.0
    %362 = vmatpush.msra.mxu0 0.0
    %363 = vmatpush.msra.mxu0 0.0
    %364 = vmatpush.msra.mxu0 0.0
    %365 = vmatpush.msra.mxu0 0.0
    %366 = vmatpush.msra.mxu0 0.0
    %367 = vmatpush.msra.mxu0 0.0
    %368 = vmatpush.msra.mxu0 0.0
    %369 = vmatpush.msra.mxu0 0.0
    %370 = vmatpush.msra.mxu0 0.0
    %371 = vmatpush.msra.mxu0 0.0
    %372 = vmatpush.msra.mxu0 0.0
    %373 = vmatpush.msra.mxu0 %v319
    %374 = vmatpush.msra.mxu0 %v287
    %375 = vmatpush.msra.mxu0 %v304
    %376 = vmatmul.f32.gmra.mxu0 %v332
    %v377 = vpop.f32.mrf.mxu0
    %v378 = vadd.f32 %v323, %v377
    %379 = vmatmul.f32.gmra.mxu0 %v335
    %v380 = vpop.f32.mrf.mxu0
    %v381 = vadd.f32 %v328, %v380
    %382 = vdwg.mxu0
    %383 = vmatpush.msra.mxu0 %v47
    %384 = vmatpush.msra.mxu0 %v46
    %385 = vmatpush.msra.mxu0 %v45
    %386 = vmatpush.msra.mxu0 %v44
    %387 = vmatpush.msra.mxu0 %v43
    %388 = vmatpush.msra.mxu0 %v42
    %389 = vmatpush.msra.mxu0 %v41
    %390 = vmatpush.msra.mxu0 %v40
    %391 = vmatpush.msra.mxu0 %v39
    %392 = vmatpush.msra.mxu0 %v38
    %393 = vmatpush.msra.mxu0 %v37
    %394 = vmatpush.msra.mxu0 %v36
    %395 = vmatpush.msra.mxu0 %v35
    %396 = vmatpush.msra.mxu0 %v34
    %397 = vmatpush.msra.mxu0 %v33
    %398 = vmatpush.msra.mxu0 %v32
    %399 = vmatmul.f32.gmra.mxu0 %v355
    %v400 = vpop.f32.mrf.mxu0
    %v401 = vadd.f32 0.0, %v400
    %402 = vmatmul.f32.gmra.mxu0 %v358
    %v403 = vpop.f32.mrf.mxu0
    %v404 = vadd.f32 0.0, %v403
    %405 = vdwg.mxu0
    %406 = vmatpush.msra.mxu0 %v63
    %407 = vmatpush.msra.mxu0 %v62
    %408 = vmatpush.msra.mxu0 %v61
    %409 = vmatpush.msra.mxu0 %v60
    %410 = vmatpush.msra.mxu0 %v59
    %411 = vmatpush.msra.mxu0 %v58
    %412 = vmatpush.msra.mxu0 %v57
    %413 = vmatpush.msra.mxu0 %v56
    %414 = vmatpush.msra.mxu0 %v55
    %415 = vmatpush.msra.mxu0 %v54
    %416 = vmatpush.msra.mxu0 %v53
    %417 = vmatpush.msra.mxu0 %v52
    %418 = vmatpush.msra.mxu0 %v51
    %419 = vmatpush.msra.mxu0 %v50
    %420 = vmatpush.msra.mxu0 %v49
    %421 = vmatpush.msra.mxu0 %v48
    %422 = vmatmul.f32.gmra.mxu0 %v378
    %v423 = vpop.f32.mrf.mxu0
    %v424 = vadd.f32 %v401, %v423
    %425 = vmatmul.f32.gmra.mxu0 %v381
    %v426 = vpop.f32.mrf.mxu0
    %v427 = vadd.f32 %v404, %v426
    %428 = vdwg.mxu0
    %v429 = vmul.f32 %v355, %v355
    %v430 = vmul.f32 %v378, %v378
    %v431 = vmul.f32 %v358, %v358
    %v432 = vmul.f32 %v381, %v381
    %433 = vmatpush.msra.mxu0 %v47
    %434 = vmatpush.msra.mxu0 %v46
    %435 = vmatpush.msra.mxu0 %v45
    %436 = vmatpush.msra.mxu0 %v44
    %437 = vmatpush.msra.mxu0 %v43
    %438 = vmatpush.msra.mxu0 %v42
    %439 = vmatpush.msra.mxu0 %v41
    %440 = vmatpush.msra.mxu0 %v40
    %441 = vmatpush.msra.mxu0 %v39
    %442 = vmatpush.msra.mxu0 %v38
    %443 = vmatpush.msra.mxu0 %v37
    %444 = vmatpush.msra.mxu0 %v36
    %445 = vmatpush.msra.mxu0 %v35
    %446 = vmatpush.msra.mxu0 %v34
    %447 = vmatpush.msra.mxu0 %v33
    %448 = vmatpush.msra.mxu0 %v32
    %449 = vmatmul.f32.gmra.mxu0 %v429
    %v450 = vpop.f32.mrf.mxu0
    %v451 = vadd.f32 0.0, %v450
    %452 = vmatmul.f32.gmra.mxu0 %v431
    %v453 = vpop.f32.mrf.mxu0
    %v454 = vadd.f32 0.0, %v453
    %455 = vdwg.mxu0
    %456 = vmatpush.msra.mxu0 %v63
    %457 = vmatpush.msra.mxu0 %v62
    %458 = vmatpush.msra.mxu0 %v61
    %459 = vmatpush.msra.mxu0 %v60
    %460 = vmatpush.msra.mxu0 %v59
    %461 = vmatpush.msra.mxu0 %v58
    %462 = vmatpush.msra.mxu0 %v57
    %463 = vmatpush.msra.mxu0 %v56
    %464 = vmatpush.msra.mxu0 %v55
    %465 = vmatpush.msra.mxu0 %v54
    %466 = vmatpush.msra.mxu0 %v53
    %467 = vmatpush.msra.mxu0 %v52
    %468 = vmatpush.msra.mxu0 %v51
    %469 = vmatpush.msra.mxu0 %v50
    %470 = vmatpush.msra.mxu0 %v49
    %471 = vmatpush.msra.mxu0 %v48
    %472 = vmatmul.f32.gmra.mxu0 %v430
    %v473 = vpop.f32.mrf.mxu0
    %v474 = vadd.f32 %v451, %v473
    %475 = vmatmul.f32.gmra.mxu0 %v432
    %v476 = vpop.f32.mrf.mxu0
    %v477 = vadd.f32 %v454, %v476
    %478 = vdwg.mxu0
    %v479 = vmul.f32 %v424, %v424
    %v480 = vmul.f32 %v427, %v427
    %v481 = vsub.f32 %v474, %v479
    %v482 = vsub.f32 %v477, %v480
    %v483 = vadd.f32 %v481, 1e-05
    %v484 = vadd.f32 %v482, 1e-05
    %v485 = vrsqrt.pop %v483
    %v486 = vmul.f32 %v485, %v483
    %v487 = vmul.f32 %v486, %v485
    %v488 = vmul.f32 0.5, %v487
    %v489 = vsub.f32 1.5, %v488
    %v490 = vmul.f32 %v485, %v489
    %vm491 = vweird.f32 %v483
    %vm492 = vweird.f32 %v485
    %vm493 = vmor %vm491, %vm492
    %v494 = vsel %vm493, %v485, %v490
    %v495 = vrsqrt.pop %v484
    %v496 = vmul.f32 %v495, %v484
    %v497 = vmul.f32 %v496, %v495
    %v498 = vmul.f32 0.5, %v497
    %v499 = vsub.f32 1.5, %v498
    %v500 = vmul.f32 %v495, %v499
    %vm501 = vweird.f32 %v484
    %vm502 = vweird.f32 %v495
    %vm503 = vmor %vm501, %vm502
    %v504 = vsel %vm503, %v495, %v500
    %v505 = vmul.f32 %v67, %v494
    %v506 = vmul.f32 %v68, %v504
    %v507 = vmul.f32 %v505, %v424
    %v508 = vmul.f32 %v506, %v427
    %v509 = vsub.f32 %v69, %v507
    %v510 = vsub.f32 %v70, %v508
    %511 = vst [vmem:[#allocation1] ss:$2 sm:$0xff] %v64
    %v512 = vld.sshfl [vmem:[#allocation1] sm:$0xff pattern:$0x75316420]
    %v513 = vld.sshfl [vmem:[#allocation1 + $0x8] sm:$0xff pattern:$0x75316420]
    %v515 = vsel %vm179, %v505, 0
    %v518 = vsel %vm179, %v506, 0
    %v520 = vsel %vm183, %v512, 0
    %v522 = vsel %vm183, %v513, 0
    %524 = vmatpush.msra.mxu0 0.0
    %525 = vmatpush.msra.mxu0 0.0
    %526 = vmatpush.msra.mxu0 0.0
    %527 = vmatpush.msra.mxu0 0.0
    %528 = vmatpush.msra.mxu0 0.0
    %529 = vmatpush.msra.mxu0 0.0
    %530 = vmatpush.msra.mxu0 0.0
    %531 = vmatpush.msra.mxu0 0.0
    %532 = vmatpush.msra.mxu0 0.0
    %533 = vmatpush.msra.mxu0 0.0
    %534 = vmatpush.msra.mxu0 0.0
    %535 = vmatpush.msra.mxu0 0.0
    %536 = vmatpush.msra.mxu0 0.0
    %537 = vmatpush.msra.mxu0 0.0
    %538 = vmatpush.msra.mxu0 0.0
    %539 = vmatpush.msra.mxu0 %v520
    %540 = vmatmul.f32.gmra.mxu0 %v515
    %v541 = vpop.f32.mrf.mxu0
    %v542 = vadd.f32 0.0, %v541
    %543 = vmatmul.f32.gmra.mxu0 %v518
    %v544 = vpop.f32.mrf.mxu0
    %v545 = vadd.f32 0.0, %v544
    %546 = vdwg.mxu0
    %547 = vmatpush.msra.mxu0 0.0
    %548 = vmatpush.msra.mxu0 0.0
    %549 = vmatpush.msra.mxu0 0.0
    %550 = vmatpush.msra.mxu0 0.0
    %551 = vmatpush.msra.mxu0 0.0
    %552 = vmatpush.msra.mxu0 0.0
    %553 = vmatpush.msra.mxu0 0.0
    %554 = vmatpush.msra.mxu0 0.0
    %555 = vmatpush.msra.mxu0 0.0
    %556 = vmatpush.msra.mxu0 0.0
    %557 = vmatpush.msra.mxu0 0.0
    %558 = vmatpush.msra.mxu0 0.0
    %559 = vmatpush.msra.mxu0 0.0
    %560 = vmatpush.msra.mxu0 0.0
    %561 = vmatpush.msra.mxu0 0.0
    %562 = vmatpush.msra.mxu0 %v522
    %563 = vmatmul.f32.gmra.mxu0 %v515
    %v564 = vpop.f32.mrf.mxu0
    %v565 = vadd.f32 0.0, %v564
    %566 = vmatmul.f32.gmra.mxu0 %v518
    %v567 = vpop.f32.mrf.mxu0
    %v568 = vadd.f32 0.0, %v567
    %569 = vdwg.mxu0
    %570 = vst [vmem:[#allocation1] ss:$2 sm:$0xff] %v64
    %v571 = vld.sshfl [vmem:[#allocation1] sm:$0xff pattern:$0x75316420]
    %v572 = vld.sshfl [vmem:[#allocation1 + $0x8] sm:$0xff pattern:$0x75316420]
    %v574 = vsel %vm179, %v509, 0
    %v577 = vsel %vm179, %v510, 0
    %v579 = vsel %vm183, %v571, 0
    %v581 = vsel %vm183, %v572, 0
    %583 = vmatpush.msra.mxu0 0.0
    %584 = vmatpush.msra.mxu0 0.0
    %585 = vmatpush.msra.mxu0 0.0
    %586 = vmatpush.msra.mxu0 0.0
    %587 = vmatpush.msra.mxu0 0.0
    %588 = vmatpush.msra.mxu0 0.0
    %589 = vmatpush.msra.mxu0 0.0
    %590 = vmatpush.msra.mxu0 0.0
    %591 = vmatpush.msra.mxu0 0.0
    %592 = vmatpush.msra.mxu0 0.0
    %593 = vmatpush.msra.mxu0 0.0
    %594 = vmatpush.msra.mxu0 0.0
    %595 = vmatpush.msra.mxu0 0.0
    %596 = vmatpush.msra.mxu0 0.0
    %597 = vmatpush.msra.mxu0 0.0
    %598 = vmatpush.msra.mxu0 %v579
    %599 = vmatmul.f32.gmra.mxu0 %v574
    %v600 = vpop.f32.mrf.mxu0
    %v601 = vadd.f32 0.0, %v600
    %602 = vmatmul.f32.gmra.mxu0 %v577
    %v603 = vpop.f32.mrf.mxu0
    %v604 = vadd.f32 0.0, %v603
    %605 = vdwg.mxu0
    %606 = vmatpush.msra.mxu0 0.0
    %607 = vmatpush.msra.mxu0 0.0
    %608 = vmatpush.msra.mxu0 0.0
    %609 = vmatpush.msra.mxu0 0.0
    %610 = vmatpush.msra.mxu0 0.0
    %611 = vmatpush.msra.mxu0 0.0
    %612 = vmatpush.msra.mxu0 0.0
    %613 = vmatpush.msra.mxu0 0.0
    %614 = vmatpush.msra.mxu0 0.0
    %615 = vmatpush.msra.mxu0 0.0
    %616 = vmatpush.msra.mxu0 0.0
    %617 = vmatpush.msra.mxu0 0.0
    %618 = vmatpush.msra.mxu0 0.0
    %619 = vmatpush.msra.mxu0 0.0
    %620 = vmatpush.msra.mxu0 0.0
    %621 = vmatpush.msra.mxu0 %v581
    %622 = vmatmul.f32.gmra.mxu0 %v574
    %v623 = vpop.f32.mrf.mxu0
    %v624 = vadd.f32 0.0, %v623
    %625 = vmatmul.f32.gmra.mxu0 %v577
    %v626 = vpop.f32.mrf.mxu0
    %v627 = vadd.f32 0.0, %v626
    %628 = vdwg.mxu0
    %v629 = vmul.f32 %v355, %v542
    %v630 = vmul.f32 %v378, %v565
    %v631 = vmul.f32 %v358, %v545
    %v632 = vmul.f32 %v381, %v568
    %v633 = vadd.f32 %v629, %v601
    %v634 = vadd.f32 %v630, %v624
    %v635 = vadd.f32 %v631, %v604
    %v636 = vadd.f32 %v632, %v627
    %vm637 = vcmp.ge.f32.partialorder %v633, 0.0
    %vm638 = vcmp.ge.f32.partialorder %v634, 0.0
    %vm639 = vcmp.ge.f32.partialorder %v635, 0.0
    %vm640 = vcmp.ge.f32.partialorder %v636, 0.0
    %v641 = vmul.f32 %v633, 0.2
    %v642 = vmul.f32 %v634, 0.2
    %v643 = vmul.f32 %v635, 0.2
    %v644 = vmul.f32 %v636, 0.2
    %v645 = vsel %vm637, %v633, %v641
    %v646 = vsel %vm638, %v634, %v642
    %v647 = vsel %vm639, %v635, %v643
    %v648 = vsel %vm640, %v636, %v644
    %649 = vrot.lane.b32.xlu0 %v645, 1
    %v650 = vpop.permute.xlu0 %649
    %651 = vrot.lane.b32.xlu0 %v647, 1
    %v652 = vpop.permute.xlu0 %651
    %653 = vrot.lane.b32.xlu0 %v646, 1
    %v654 = vpop.permute.xlu0 %653
    %655 = vrot.lane.b32.xlu0 %v648, 1
    %v656 = vpop.permute.xlu0 %655
    %v657 = vsel %vm294, %v650, %v654
    %v658 = vsel %vm294, %v652, %v656
    %v659 = vsel %vm294, %v654, %v650
    %v660 = vsel %vm294, %v656, %v652
    %v661 = vmul.f32 %v659, %v301
    %v662 = vmul.f32 %v657, %v302
    %v663 = vmul.f32 %v660, %v301
    %v664 = vmul.f32 %v658, %v302
    %665 = vrot.lane.b32.xlu0 %v645, 127
    %v666 = vpop.permute.xlu0 %665
    %667 = vrot.lane.b32.xlu0 %v647, 127
    %v668 = vpop.permute.xlu0 %667
    %669 = vrot.lane.b32.xlu0 %v646, 127
    %v670 = vpop.permute.xlu0 %669
    %671 = vrot.lane.b32.xlu0 %v648, 127
    %v672 = vpop.permute.xlu0 %671
    %v673 = vsel %vm309, %v666, %v670
    %v674 = vsel %vm309, %v668, %v672
    %v675 = vsel %vm309, %v670, %v666
    %v676 = vsel %vm309, %v672, %v668
    %v677 = vmul.f32 %v673, %v316
    %v678 = vmul.f32 %v675, %v317
    %v679 = vmul.f32 %v674, %v316
    %v680 = vmul.f32 %v676, %v317
    %681 = vset.pattern.permute.xlu0 1
    %682 = vperm.xlu0 %681, %v75
    %v683 = vpop.permute.xlu0 %682
    %685 = vset.pattern.permute.xlu0 1
    %686 = vperm.xlu0 %685, %v76
    %v687 = vpop.permute.xlu0 %686
    %vm689 = vcmask 457728
    %v691 = vsel %vm689, %v73, 0
    %v694 = vsel %vm689, %v74, 0
    %696 = vmatpush.msra.mxu0 0.0
    %697 = vmatpush.msra.mxu0 0.0
    %698 = vmatpush.msra.mxu0 0.0
    %699 = vmatpush.msra.mxu0 0.0
    %700 = vmatpush.msra.mxu0 0.0
    %701 = vmatpush.msra.mxu0 0.0
    %702 = vmatpush.msra.mxu0 0.0
    %703 = vmatpush.msra.mxu0 0.0
    %704 = vmatpush.msra.mxu0 0.0
    %705 = vmatpush.msra.mxu0 %v30
    %706 = vmatpush.msra.mxu0 %v679
    %707 = vmatpush.msra.mxu0 %v677
    %708 = vmatpush.msra.mxu0 %v647
    %709 = vmatpush.msra.mxu0 %v645
    %710 = vmatpush.msra.mxu0 %v663
    %711 = vmatpush.msra.mxu0 %v661
    %712 = vmatmul.f32.gmra.mxu0 %v691
    %v713 = vpop.f32.mrf.mxu0
    %v714 = vadd.f32 %v683, %v713
    %715 = vmatmul.f32.gmra.mxu0 %v694
    %v716 = vpop.f32.mrf.mxu0
    %v717 = vadd.f32 %v687, %v716
    %718 = vdwg.mxu0
    %719 = vmatpush.msra.mxu0 0.0
    %720 = vmatpush.msra.mxu0 0.0
    %721 = vmatpush.msra.mxu0 0.0
    %722 = vmatpush.msra.mxu0 0.0
    %723 = vmatpush.msra.mxu0 0.0
    %724 = vmatpush.msra.mxu0 0.0
    %725 = vmatpush.msra.mxu0 0.0
    %726 = vmatpush.msra.mxu0 0.0
    %727 = vmatpush.msra.mxu0 0.0
    %728 = vmatpush.msra.mxu0 %v31
    %729 = vmatpush.msra.mxu0 %v680
    %730 = vmatpush.msra.mxu0 %v678
    %731 = vmatpush.msra.mxu0 %v648
    %732 = vmatpush.msra.mxu0 %v646
    %733 = vmatpush.msra.mxu0 %v664
    %734 = vmatpush.msra.mxu0 %v662
    %735 = vmatmul.f32.gmra.mxu0 %v691
    %v736 = vpop.f32.mrf.mxu0
    %v737 = vadd.f32 %v683, %v736
    %738 = vmatmul.f32.gmra.mxu0 %v694
    %v739 = vpop.f32.mrf.mxu0
    %v740 = vadd.f32 %v687, %v739
    %741 = vdwg.mxu0
    %742 = vst [vmem:[#allocation2] sm:$0xff] %v714
    %743 = vst [vmem:[#allocation2 + $0x8] sm:$0xff] %v737
    %744 = vst [vmem:[#allocation2 + $0x10] sm:$0xff] %v717
    %745 = vst [vmem:[#allocation2 + $0x18] sm:$0xff] %v740
    // Predicated region
    $region34: #{tpu_custom_call.1} parent=1 // pred_check
      _
    $region35: #{tpu_custom_call.1} parent=1 // pred_check_branch
      %747 = sbr.rel (0) target = $region37
    $region36: #{tpu_custom_call.1} parent=1 // pred_region
      %749 = vsyncadd [#allocation3], 0
      %s750 = sshll.u32 [#allocation2], 4
      %s751 = int_to_ptr.vmem [resolvable:$true] %s750
      %s752 = sshll.u32 %s8, 4
      %s753 = int_to_ptr.hbm [resolvable:$true] %s752
      %758 = dma.vmem_to_hbm [thread:$0]  %s751, 512, %s753, [#allocation3], 256, 256, 16
    $region37: #{tpu_custom_call.1} parent=1 // pred_fallthru
      _
    // Predicated region
    $region38: #{tpu_custom_call.1} parent=1 // pred_check
      _
    $region39: #{tpu_custom_call.1} parent=1 // pred_check_branch
      %760 = sbr.rel (0) target = $region41
    $region40: #{tpu_custom_call.1} parent=1 // pred_region
      %762 = dma.done [#allocation3], 512
    $region41: #{tpu_custom_call.1} parent=1 // pred_fallthru
      _
    %763 = vsyncpa [#allocation3], 1

</llo_original>
